<compile_context>
chip_gen: v5e
topology: v5e:2x2
jax: 0.10.0
libtpu: 0.0.40
codegen_flags: <defaults>
</compile_context>

<pallas_src>
import functools

import jax
import jax.numpy as jnp
from jax.experimental import pallas as pl
from jax.experimental.pallas import tpu as pltpu


def _frn_kernel(eps_ref, x_ref, p_ref, o_ref, *, inv_hw):
    # x_ref: (TR, HW)  VMEM      p_ref: (TR, 3) VMEM (gamma | beta | tau)
    # eps_ref: (1,)    SMEM scalar (already |eps|)
    x = x_ref[...].astype(jnp.float32)                       # (TR, HW)
    p = p_ref[...]                                           # (TR, 3)
    gamma = p[:, 0:1]
    beta = p[:, 1:2]
    tau = p[:, 2:3]

    # Per-row mean of squares over the true spatial extent.
    nu2 = jnp.sum(x * x, axis=-1, keepdims=True) * inv_hw    # (TR, 1)

    # Fold gamma into the normalization scale: one full-tile FMA + max pass.
    scale = gamma * jax.lax.rsqrt(nu2 + eps_ref[0])           # (TR, 1)
    y = jnp.maximum(x * scale + beta, tau)                    # (TR, HW)
    o_ref[...] = y.astype(o_ref.dtype)


def _round_up(v, m):
    return (v + m - 1) // m * m


def _default_block_bytes():
    # v7x (3.2 TB/s HBM, 64 MiB VMEM): bigger blocks amortize per-step
    # overhead; v5e/v6e are already past the knee at ~4 MiB.
    try:
        kind = jax.devices()[0].device_kind.lower()
    except Exception:  # pragma: no cover - defensive
        kind = ""
    if "v7" in kind:
        return 6 * 1024 * 1024
    return 4 * 1024 * 1024


def filter_response_norm(x, gamma, beta, tau, eps, *, target_block_bytes=None):
    """x: (N, C, H, W); gamma/beta/tau: (1, C, 1, 1); eps: scalar."""
    N, C, H, W = x.shape
    HW = H * W
    R = N * C
    if target_block_bytes is None:
        target_block_bytes = _default_block_bytes()

    # Free contiguous reshape to rows; no padding, no extra HBM passes.
    x2 = x.reshape(R, HW)

    # Consolidate per-channel params into one tiny (R, 3) array (one DMA/step).
    g = jnp.broadcast_to(gamma.reshape(C).astype(jnp.float32), (N, C)).reshape(R)
    b = jnp.broadcast_to(beta.reshape(C).astype(jnp.float32), (N, C)).reshape(R)
    t = jnp.broadcast_to(tau.reshape(C).astype(jnp.float32), (N, C)).reshape(R)
    params = jnp.stack([g, b, t], axis=-1)                    # (R, 3)

    # |eps| folded on the host; scalar lives in SMEM.
    eps1 = jnp.abs(jnp.asarray(eps, dtype=jnp.float32)).reshape(1)

    # Dtype-aware row-tile sizing.  Total live VMEM with default
    # double-buffering of input + output ~= 4x this block (+ tiny params).
    bytes_per_row = HW * x.dtype.itemsize
    tr = max(8, (target_block_bytes // max(bytes_per_row, 1)) // 8 * 8)
    # Keep >= ~4 grid steps when the row count allows it (2 TCs on v7x need
    # multiple parallel steps; everyone benefits from DMA pipelining).
    steps_cap = max(8, (R // 4) // 8 * 8)
    tr = min(tr, steps_cap)
    tr = min(tr, _round_up(R, 8))
    if R < 8:
        tr = R  # full-extent row block; (8, .) rule waived when block == dim.
    grid = (pl.cdiv(R, tr),)

    # TODO(synk): for extreme shapes where even 8 rows x HW exceeds the VMEM
    # budget (tiny N*C, huge H*W), add a second grid axis over HW with an
    # accumulate-then-finalize reduction; not needed for ResNet-style shapes.

    kernel = functools.partial(_frn_kernel, inv_hw=1.0 / HW)

    out = pl.pallas_call(
        kernel,
        out_shape=jax.ShapeDtypeStruct((R, HW), x.dtype),
        grid=grid,
        in_specs=[
            pl.BlockSpec(memory_space=pltpu.SMEM),            # |eps| scalar
            pl.BlockSpec((tr, HW), lambda i: (i, 0)),          # x rows
            pl.BlockSpec((tr, 3), lambda i: (i, 0)),           # gamma/beta/tau
        ],
        out_specs=pl.BlockSpec((tr, HW), lambda i: (i, 0)),
        compiler_params=pltpu.CompilerParams(
            dimension_semantics=("parallel",),
            vmem_limit_bytes=48 * 1024 * 1024,
        ),
    )(eps1, x2, params)

    return out.reshape(N, C, H, W)


def frn_reference(x, gamma, beta, tau, eps):
    nu2 = jnp.mean(x * x, axis=(2, 3), keepdims=True)
    xn = x * jax.lax.rsqrt(nu2 + jnp.abs(eps))
    return jnp.maximum(gamma * xn + beta, tau)


if __name__ == "__main__":
    key = jax.random.PRNGKey(0)
    N, C, H, W = 2, 4, 16, 16

    x = jax.random.normal(key, (N, C, H, W), dtype=jnp.float32)

    # Deterministic parameter init matching reset_parameters():
    #   gamma = ones, beta = zeros, tau = zeros, eps = 1e-6 (fixed)
    gamma = jnp.ones((1, C, 1, 1), dtype=jnp.float32)
    beta = jnp.zeros((1, C, 1, 1), dtype=jnp.float32)
    tau = jnp.zeros((1, C, 1, 1), dtype=jnp.float32)
    eps = jnp.float32(1e-6)

    y = filter_response_norm(x, gamma, beta, tau, eps)
    y = jax.block_until_ready(y)

    y_ref = frn_reference(x, gamma, beta, tau, eps)
    assert y.shape == (N, C, H, W)
    assert jnp.allclose(y, y_ref, atol=1e-5, rtol=1e-5)

    print("KERNEL_OK")
</pallas_src>

<mosaic_0001>
module attributes {stable_mosaic.version = 11 : i64} {
  func.func @_frn_kernel(%arg0: i32, %arg1: memref<1xf32, #tpu.memory_space<smem>>, %arg2: memref<8x256xf32, #tpu.memory_space<vmem>>, %arg3: memref<8x3xf32, #tpu.memory_space<vmem>>, %arg4: memref<8x256xf32, #tpu.memory_space<vmem>>) attributes {dimension_semantics = [#tpu.dimension_semantics<parallel>], iteration_bounds = array<i64: 1>, scalar_prefetch = 0 : i64, scratch_operands = 0 : i64, tpu.core_type = #tpu.core_type<tc>, window_params = [{transform_indices = @transform_0, window_bounds = array<i64: 1>}, {transform_indices = @transform_1, window_bounds = array<i64: 8, 256>}, {transform_indices = @transform_2, window_bounds = array<i64: 8, 3>}, {transform_indices = @transform_3, window_bounds = array<i64: 8, 256>}]} {
    %c0 = arith.constant 0 : index
    %c0_0 = arith.constant 0 : index
    %0 = vector.load %arg2[%c0, %c0_0] : memref<8x256xf32, #tpu.memory_space<vmem>>, vector<8x256xf32>
    %c0_1 = arith.constant 0 : index
    %c0_2 = arith.constant 0 : index
    %1 = vector.load %arg3[%c0_1, %c0_2] : memref<8x3xf32, #tpu.memory_space<vmem>>, vector<8x3xf32>
    %2 = vector.extract_strided_slice %1 {offsets = [0, 0], sizes = [8, 1], strides = [1, 1]} : vector<8x3xf32> to vector<8x1xf32>
    %3 = vector.extract_strided_slice %1 {offsets = [0, 1], sizes = [8, 1], strides = [1, 1]} : vector<8x3xf32> to vector<8x1xf32>
    %4 = vector.extract_strided_slice %1 {offsets = [0, 2], sizes = [8, 1], strides = [1, 1]} : vector<8x3xf32> to vector<8x1xf32>
    %5 = arith.mulf %0, %0 : vector<8x256xf32>
    %cst = arith.constant dense<0.000000e+00> : vector<8xf32>
    %6 = vector.multi_reduction <add>, %5, %cst [1] : vector<8x256xf32> to vector<8xf32>
    %7 = vector.shape_cast %6 : vector<8xf32> to vector<8x1xf32>
    %cst_3 = arith.constant 3.906250e-03 : f32
    %8 = vector.broadcast %cst_3 : f32 to vector<8x1xf32>
    %9 = arith.mulf %7, %8 : vector<8x1xf32>
    %c0_4 = arith.constant 0 : index
    %10 = memref.load %arg1[%c0_4] : memref<1xf32, #tpu.memory_space<smem>>
    %11 = vector.broadcast %10 : f32 to vector<8x1xf32>
    %12 = arith.addf %9, %11 : vector<8x1xf32>
    %13 = math.rsqrt %12 : vector<8x1xf32>
    %14 = arith.mulf %2, %13 : vector<8x1xf32>
    %15 = vector.broadcast %14 : vector<8x1xf32> to vector<8x256xf32>
    %16 = arith.mulf %0, %15 : vector<8x256xf32>
    %17 = vector.broadcast %3 : vector<8x1xf32> to vector<8x256xf32>
    %18 = arith.addf %16, %17 : vector<8x256xf32>
    %19 = vector.broadcast %4 : vector<8x1xf32> to vector<8x256xf32>
    %20 = arith.maximumf %18, %19 : vector<8x256xf32>
    %c0_5 = arith.constant 0 : index
    %c0_6 = arith.constant 0 : index
    %21 = vector.load %arg4[%c0_5, %c0_6] : memref<8x256xf32, #tpu.memory_space<vmem>>, vector<8x256xf32>
    tpu.vector_store %arg4[%c0_5, %c0_6], %20 {strides = array<i32>} : memref<8x256xf32, #tpu.memory_space<vmem>>, vector<8x256xf32>,
    return
  }
  func.func @transform_0(%arg0: i32) -> i32 {
    %c0_i32 = arith.constant 0 : i32
    %c0_i32_0 = arith.constant 0 : i32
    return %c0_i32 : i32
  }
  func.func @transform_1(%arg0: i32) -> (i32, i32) {
    %c0_i32 = arith.constant 0 : i32
    %c0_i32_0 = arith.constant 0 : i32
    return %arg0, %c0_i32 : i32, i32
  }
  func.func @transform_2(%arg0: i32) -> (i32, i32) {
    %c0_i32 = arith.constant 0 : i32
    %c0_i32_0 = arith.constant 0 : i32
    return %arg0, %c0_i32 : i32, i32
  }
  func.func @transform_3(%arg0: i32) -> (i32, i32) {
    %c0_i32 = arith.constant 0 : i32
    %c0_i32_0 = arith.constant 0 : i32
    return %arg0, %c0_i32 : i32, i32
  }
}

</mosaic_0001>

<llo_original>
// kernel: tpu_custom_call.1
$region0: #{tpu_custom_call.1}
  #allocation0 [shape = 'u32[]', space=smem, size = 0x4, offset = 0x4, fixed_abs, tag = 'smem constant byte address 0x4 - core index']
  #allocation1 [shape = 'u32[72,128]{1,0:T(1,128)}', space=vmem, size = 0x9000, scoped, tag = 'internal scratch']
  #allocation2 [shape = 'f32[1]{0:T(128)S(6)}', space=smem, size = 0x200, scoped, tag = 'scoped memory for tpu_custom_call.1']
  %s0 = inlined_call_operand.<no memory space> [shape: f32[1], index: 0, kind: input, shape index: {}]
  %s1 = inlined_call_operand.hbm [shape: f32[8,256], index: 1, kind: input, shape index: {}]
  %s2 = inlined_call_operand.vmem [shape: f32[8,3], index: 2, kind: input, shape index: {}]
  %s3 = inlined_call_operand.hbm [shape: f32[8,256], index: 3, kind: output, shape index: {}]
  %s4 = sld [smem:[#allocation0]]
  $region26: #{tpu_custom_call.1} parent=0
    _
  %s6 = ssub.s32 1, %s4
  %s7 = scalar_select 0, %s6, %s4
  %8 = sst [smem:[#allocation2]] %s0
  $region1: #{tpu_custom_call.1} parent=0
    #allocation3 [shape = 'u8[8192]{0}', space=vmem, size = 0x2000, scoped, tag = 'input window, operand 1, single buffered']
    #allocation4 [shape = 's32[1]{0}', space=sflag, size = 0x4, scoped, tag = 'scoped memory for tpu_custom_call.1']
    #allocation5 [shape = 's32[1]{0}', space=sflag, size = 0x4, scoped, tag = 'scoped memory for tpu_custom_call.1']
    #allocation6 [shape = 'u8[8192]{0}', space=vmem, size = 0x2000, scoped, tag = 'output window, operand 0, single buffered']
    %9 = vsyncpa [#allocation4], 0
    %10 = vsyncpa [#allocation5], 0
    // Predicated region
    $region2: #{tpu_custom_call.1} parent=1 // pred_check
      _
    $region3: #{tpu_custom_call.1} parent=1 // pred_check_branch
      %12 = sbr.rel (0) target = $region5
    $region4: #{tpu_custom_call.1} parent=1 // pred_region
      _
    $region5: #{tpu_custom_call.1} parent=1 // pred_fallthru
      _
    // Predicated region
    $region6: #{tpu_custom_call.1} parent=1 // pred_check
      _
    $region7: #{tpu_custom_call.1} parent=1 // pred_check_branch
      %14 = sbr.rel (0) target = $region9
    $region8: #{tpu_custom_call.1} parent=1 // pred_region
      %16 = vsyncadd [#allocation4], 0
      %s18 = sshll.u32 %s1, 4
      %s19 = int_to_ptr.hbm [resolvable:$true] %s18
      %s20 = sshll.u32 [#allocation3], 4
      %s21 = int_to_ptr.vmem [resolvable:$true] %s20
      %23 = dma.hbm_to_vmem [thread:$0]  %s19, 256, %s21, [#allocation4]
    $region9: #{tpu_custom_call.1} parent=1 // pred_fallthru
      _
    // Predicated region
    $region10: #{tpu_custom_call.1} parent=1 // pred_check
      _
    $region11: #{tpu_custom_call.1} parent=1 // pred_check_branch
      %25 = sbr.rel (0) target = $region13
    $region12: #{tpu_custom_call.1} parent=1 // pred_region
      _
    $region13: #{tpu_custom_call.1} parent=1 // pred_fallthru
      _
    // Predicated region
    $region14: #{tpu_custom_call.1} parent=1 // pred_check
      _
    $region15: #{tpu_custom_call.1} parent=1 // pred_check_branch
      %27 = sbr.rel (0) target = $region17
    $region16: #{tpu_custom_call.1} parent=1 // pred_region
      %29 = dma.done [#allocation4], 256
    $region17: #{tpu_custom_call.1} parent=1 // pred_fallthru
      _
    %v30 = vld [vmem:[#allocation3] sm:$0xff]
    %v31 = vld [vmem:[#allocation3 + $0x8] sm:$0xff]
    %v32 = vld [vmem:[%s2] sm:$0xff]
    %v33 = vmul.f32 %v30, %v30
    %v34 = vmul.f32 %v31, %v31
    %v35 = vadd.f32 %v33, %v34
    %36 = vadd.xlane.f32.xlu0 %v35
    %v37 = vpop.xlane.xlu0 %36
    %v38 = vmul.f32 %v37, 0.00390625
    %s39 = sld [smem:[#allocation2]]
    %v40 = vstv %s39
    %v41 = vadd.f32 %v38, %v40
    %v42 = vrsqrt.pop %v41
    %v43 = vmul.f32 %v42, %v41
    %v44 = vmul.f32 %v43, %v42
    %v45 = vmul.f32 0.5, %v44
    %v46 = vsub.f32 1.5, %v45
    %v47 = vmul.f32 %v42, %v46
    %vm48 = vweird.f32 %v41
    %vm49 = vweird.f32 %v42
    %vm50 = vmor %vm48, %vm49
    %v51 = vsel %vm50, %v42, %v47
    %v52 = vmul.f32 %v32, %v51
    %54 = vset.pattern.permute.xlu0 0
    %55 = vperm.xlu0 %54, %v52
    %v56 = vpop.permute.xlu0 %55
    %v58 = vmul.f32 %v30, %v56
    %v59 = vmul.f32 %v31, %v56
    %61 = vset.pattern.permute.xlu0 1
    %62 = vperm.xlu0 %61, %v32
    %v63 = vpop.permute.xlu0 %62
    %v65 = vadd.f32 %v58, %v63
    %v66 = vadd.f32 %v59, %v63
    %67 = vset.pattern.permute.xlu0 2
    %68 = vperm.xlu0 %67, %v32
    %v69 = vpop.permute.xlu0 %68
    %v71 = vmax.f32 %v65, %v69
    %v72 = vmax.f32 %v66, %v69
    %73 = vst [vmem:[#allocation6] sm:$0xff] %v71
    %74 = vst [vmem:[#allocation6 + $0x8] sm:$0xff] %v72
    // Predicated region
    $region18: #{tpu_custom_call.1} parent=1 // pred_check
      _
    $region19: #{tpu_custom_call.1} parent=1 // pred_check_branch
      %76 = sbr.rel (0) target = $region21
    $region20: #{tpu_custom_call.1} parent=1 // pred_region
      %78 = vsyncadd [#allocation5], 0
      %s80 = sshll.u32 [#allocation6], 4
      %s81 = int_to_ptr.vmem [resolvable:$true] %s80
      %s82 = sshll.u32 %s3, 4
      %s83 = int_to_ptr.hbm [resolvable:$true] %s82
      %85 = dma.vmem_to_hbm [thread:$0]  %s81, 256, %s83, [#allocation5]
    $region21: #{tpu_custom_call.1} parent=1 // pred_fallthru
      _
    // Predicated region
    $region22: #{tpu_custom_call.1} parent=1 // pred_check
      _
    $region23: #{tpu_custom_call.1} parent=1 // pred_check_branch
      %87 = sbr.rel (0) target = $region25
    $region24: #{tpu_custom_call.1} parent=1 // pred_region
      %89 = dma.done [#allocation5], 256
    $region25: #{tpu_custom_call.1} parent=1 // pred_fallthru
      _
    %90 = vsyncpa [#allocation4], 1
    %91 = vsyncpa [#allocation5], 1

</llo_original>
